<compile_context>
chip_gen: v7x
topology: tpu7x:2x2x1
jax: 0.10.0
libtpu: 0.0.40
codegen_flags: <defaults>
</compile_context>

<pallas_src>
import functools

import jax
import jax.numpy as jnp
from jax.experimental import pallas as pl
from jax.experimental.pallas import tpu as pltpu

hidden_size = 32
input_size = 6
output_size = 2

# Packed-slab layout constants.
IN_PAD = 8                      # input_size (6) + bias column (1) + zero pad (1)
SLAB_ROWS = IN_PAD + 2 * hidden_size + 8   # 8 + 64 + 8 = 80 (sublane-aligned)


def rnn_kernel(x_ref, w_ref, out_ref, *, batch, seq_len):
    # x_ref: (T*B, IN_PAD) time-major, cols [x | 1 | 0]
    # w_ref: (SLAB_ROWS, H) packed f32 slab:
    #   rows 0:6          W_ih
    #   row  6            b_ih + b_hh
    #   row  7            zeros
    #   rows 8:40         W_hh
    #   rows 40:72        W_fc  (cols 0:O, rest zero)
    #   row  72           b_fc  (cols 0:O, rest zero)
    #   rows 73:80        zeros
    # out_ref: (B, O)
    B, T, H, O = batch, seq_len, hidden_size, output_size

    # One-shot input projection for all timesteps (off the serial chain).
    # Bias is folded in via the ones column of x_aug and the b row of the slab.
    w_top = w_ref[pl.ds(0, IN_PAD), :]                          # (IN_PAD, H)
    xw = jnp.dot(x_ref[...], w_top,
                 preferred_element_type=jnp.float32)            # (T*B, H), time-major

    # Recurrent weight: hoisted once, cast to bf16 for single-pass MXU lowering.
    w_hh = w_ref[pl.ds(IN_PAD, H), :].astype(jnp.bfloat16)      # (H, H)

    # Serial recurrence, fully unrolled with static, sublane-contiguous slices.
    h = jnp.zeros((B, H), jnp.float32)
    for t in range(T):
        hw = jnp.dot(h.astype(jnp.bfloat16), w_hh,
                     preferred_element_type=jnp.float32)        # (B, H)
        h = jnp.tanh(xw[t * B:(t + 1) * B, :] + hw)             # add/tanh stay f32

    # Final Linear on the last hidden state (off the chain, f32).
    w_fc = w_ref[pl.ds(IN_PAD + H, H), :]                       # (H, H) lane-padded
    b_fc = w_ref[pl.ds(IN_PAD + 2 * H, 1), :]                   # (1, H) lane-padded
    out_full = jnp.dot(h, w_fc, preferred_element_type=jnp.float32) + b_fc
    out_ref[...] = out_full[:, 0:O]


@jax.jit
def rnn_forward(x, w_slab):
    """x: (B, T, I) float32, w_slab: packed (SLAB_ROWS, H) float32 -> (B, O)."""
    B, T, I = x.shape
    # Time-major + augmentation columns [x | 1 | 0] -> (T*B, IN_PAD).
    xt = jnp.swapaxes(x, 0, 1).reshape(T * B, I)
    x_aug = jnp.concatenate(
        [xt,
         jnp.ones((T * B, 1), x.dtype),
         jnp.zeros((T * B, IN_PAD - I - 1), x.dtype)],
        axis=1)

    kernel = functools.partial(rnn_kernel, batch=B, seq_len=T)
    return pl.pallas_call(
        kernel,
        out_shape=jax.ShapeDtypeStruct((B, output_size), jnp.float32),
        in_specs=[pl.BlockSpec(memory_space=pltpu.MemorySpace.VMEM)] * 2,
        out_specs=pl.BlockSpec(memory_space=pltpu.MemorySpace.VMEM),
    )(x_aug, w_slab)


def init_params(key):
    # Match PyTorch's default init distribution: U(-1/sqrt(H), 1/sqrt(H)).
    bound = 1.0 / jnp.sqrt(jnp.float32(hidden_size))
    ks = jax.random.split(key, 6)
    w_ih = jax.random.uniform(ks[0], (input_size, hidden_size), jnp.float32, -bound, bound)
    w_hh = jax.random.uniform(ks[1], (hidden_size, hidden_size), jnp.float32, -bound, bound)
    b_ih = jax.random.uniform(ks[2], (hidden_size,), jnp.float32, -bound, bound)
    b_hh = jax.random.uniform(ks[3], (hidden_size,), jnp.float32, -bound, bound)
    w_fc = jax.random.uniform(ks[4], (hidden_size, output_size), jnp.float32, -bound, bound)
    b_fc = jax.random.uniform(ks[5], (output_size,), jnp.float32, -bound, bound)
    return w_ih, w_hh, b_ih, b_hh, w_fc, b_fc


def pack_params(w_ih, w_hh, b_ih, b_hh, w_fc, b_fc):
    """Pack all weights/biases into one (SLAB_ROWS, H) f32 slab (done once)."""
    H, O, I = hidden_size, output_size, input_size
    slab = jnp.zeros((SLAB_ROWS, H), jnp.float32)
    slab = slab.at[0:I, :].set(w_ih)
    slab = slab.at[I, :].set(b_ih + b_hh)              # RNN cell adds both biases
    slab = slab.at[IN_PAD:IN_PAD + H, :].set(w_hh)
    slab = slab.at[IN_PAD + H:IN_PAD + 2 * H, 0:O].set(w_fc)
    slab = slab.at[IN_PAD + 2 * H, 0:O].set(b_fc)
    return slab


def reference(x, w_ih, w_hh, b_ih, b_hh, w_fc, b_fc):
    # Pure-JAX f32 reference of the PyTorch forward for a sanity check.
    B, T, _ = x.shape
    h = jnp.zeros((B, hidden_size), jnp.float32)
    for t in range(T):
        h = jnp.tanh(x[:, t, :] @ w_ih + h @ w_hh + b_ih + b_hh)
    return h @ w_fc + b_fc


if __name__ == "__main__":
    key = jax.random.PRNGKey(0)
    kx, kp = jax.random.split(key)
    B, T = 2, 8
    x = jax.random.normal(kx, (B, T, input_size), jnp.float32)
    raw_params = init_params(kp)
    w_slab = pack_params(*raw_params)

    out = jax.block_until_ready(rnn_forward(x, w_slab))
    ref = reference(x, *raw_params)

    assert out.shape == (B, output_size)
    # bf16 MXU operands on the recurrence -> looser tolerance vs the f32 reference.
    assert jnp.allclose(out, ref, atol=2e-2, rtol=2e-2), float(jnp.max(jnp.abs(out - ref)))

    print("KERNEL_OK")
</pallas_src>

<mosaic_0001>
module attributes {stable_mosaic.version = 11 : i64} {
  func.func @rnn_kernel(%arg0: memref<16x8xf32, #tpu.memory_space<vmem>>, %arg1: memref<80x32xf32, #tpu.memory_space<vmem>>, %arg2: memref<2x2xf32, #tpu.memory_space<vmem>>) attributes {dimension_semantics = [], scalar_prefetch = 0 : i64, scratch_operands = 0 : i64, tpu.core_type = #tpu.core_type<tc>} {
    %c0 = arith.constant 0 : index
    %c0_0 = arith.constant 0 : index
    %0 = vector.load %arg1[%c0, %c0_0] : memref<80x32xf32, #tpu.memory_space<vmem>>, vector<8x32xf32>
    %c0_1 = arith.constant 0 : index
    %c0_2 = arith.constant 0 : index
    %1 = vector.load %arg0[%c0_1, %c0_2] : memref<16x8xf32, #tpu.memory_space<vmem>>, vector<16x8xf32>
    %cst = arith.constant dense<0.000000e+00> : vector<16x32xf32>
    %2 = tpu.matmul %1, %0, %cst {dimension_numbers = #tpu.dot_dimension_numbers<[1], [0], [0], [1], [0, 0, 1, 1], [], []>} : vector<16x8xf32>, vector<8x32xf32>, vector<16x32xf32> -> vector<16x32xf32>
    %c8 = arith.constant 8 : index
    %c0_3 = arith.constant 0 : index
    %3 = vector.load %arg1[%c8, %c0_3] : memref<80x32xf32, #tpu.memory_space<vmem>>, vector<32x32xf32>
    %4 = arith.truncf %3 : vector<32x32xf32> to vector<32x32xbf16>
    %cst_4 = arith.constant 0.000000e+00 : f32
    %5 = vector.broadcast %cst_4 : f32 to vector<2x32xf32>
    %6 = arith.truncf %5 : vector<2x32xf32> to vector<2x32xbf16>
    %cst_5 = arith.constant dense<0.000000e+00> : vector<2x32xf32>
    %7 = tpu.matmul %6, %4, %cst_5 {dimension_numbers = #tpu.dot_dimension_numbers<[1], [0], [0], [1], [0, 0, 1, 1], [], []>} : vector<2x32xbf16>, vector<32x32xbf16>, vector<2x32xf32> -> vector<2x32xf32>
    %8 = vector.extract_strided_slice %2 {offsets = [0, 0], sizes = [2, 32], strides = [1, 1]} : vector<16x32xf32> to vector<2x32xf32>
    %9 = arith.addf %8, %7 : vector<2x32xf32>
    %10 = math.tanh %9 : vector<2x32xf32>
    %11 = arith.truncf %10 : vector<2x32xf32> to vector<2x32xbf16>
    %cst_6 = arith.constant dense<0.000000e+00> : vector<2x32xf32>
    %12 = tpu.matmul %11, %4, %cst_6 {dimension_numbers = #tpu.dot_dimension_numbers<[1], [0], [0], [1], [0, 0, 1, 1], [], []>} : vector<2x32xbf16>, vector<32x32xbf16>, vector<2x32xf32> -> vector<2x32xf32>
    %13 = vector.extract_strided_slice %2 {offsets = [2, 0], sizes = [2, 32], strides = [1, 1]} : vector<16x32xf32> to vector<2x32xf32>
    %14 = arith.addf %13, %12 : vector<2x32xf32>
    %15 = math.tanh %14 : vector<2x32xf32>
    %16 = arith.truncf %15 : vector<2x32xf32> to vector<2x32xbf16>
    %cst_7 = arith.constant dense<0.000000e+00> : vector<2x32xf32>
    %17 = tpu.matmul %16, %4, %cst_7 {dimension_numbers = #tpu.dot_dimension_numbers<[1], [0], [0], [1], [0, 0, 1, 1], [], []>} : vector<2x32xbf16>, vector<32x32xbf16>, vector<2x32xf32> -> vector<2x32xf32>
    %18 = vector.extract_strided_slice %2 {offsets = [4, 0], sizes = [2, 32], strides = [1, 1]} : vector<16x32xf32> to vector<2x32xf32>
    %19 = arith.addf %18, %17 : vector<2x32xf32>
    %20 = math.tanh %19 : vector<2x32xf32>
    %21 = arith.truncf %20 : vector<2x32xf32> to vector<2x32xbf16>
    %cst_8 = arith.constant dense<0.000000e+00> : vector<2x32xf32>
    %22 = tpu.matmul %21, %4, %cst_8 {dimension_numbers = #tpu.dot_dimension_numbers<[1], [0], [0], [1], [0, 0, 1, 1], [], []>} : vector<2x32xbf16>, vector<32x32xbf16>, vector<2x32xf32> -> vector<2x32xf32>
    %23 = vector.extract_strided_slice %2 {offsets = [6, 0], sizes = [2, 32], strides = [1, 1]} : vector<16x32xf32> to vector<2x32xf32>
    %24 = arith.addf %23, %22 : vector<2x32xf32>
    %25 = math.tanh %24 : vector<2x32xf32>
    %26 = arith.truncf %25 : vector<2x32xf32> to vector<2x32xbf16>
    %cst_9 = arith.constant dense<0.000000e+00> : vector<2x32xf32>
    %27 = tpu.matmul %26, %4, %cst_9 {dimension_numbers = #tpu.dot_dimension_numbers<[1], [0], [0], [1], [0, 0, 1, 1], [], []>} : vector<2x32xbf16>, vector<32x32xbf16>, vector<2x32xf32> -> vector<2x32xf32>
    %28 = vector.extract_strided_slice %2 {offsets = [8, 0], sizes = [2, 32], strides = [1, 1]} : vector<16x32xf32> to vector<2x32xf32>
    %29 = arith.addf %28, %27 : vector<2x32xf32>
    %30 = math.tanh %29 : vector<2x32xf32>
    %31 = arith.truncf %30 : vector<2x32xf32> to vector<2x32xbf16>
    %cst_10 = arith.constant dense<0.000000e+00> : vector<2x32xf32>
    %32 = tpu.matmul %31, %4, %cst_10 {dimension_numbers = #tpu.dot_dimension_numbers<[1], [0], [0], [1], [0, 0, 1, 1], [], []>} : vector<2x32xbf16>, vector<32x32xbf16>, vector<2x32xf32> -> vector<2x32xf32>
    %33 = vector.extract_strided_slice %2 {offsets = [10, 0], sizes = [2, 32], strides = [1, 1]} : vector<16x32xf32> to vector<2x32xf32>
    %34 = arith.addf %33, %32 : vector<2x32xf32>
    %35 = math.tanh %34 : vector<2x32xf32>
    %36 = arith.truncf %35 : vector<2x32xf32> to vector<2x32xbf16>
    %cst_11 = arith.constant dense<0.000000e+00> : vector<2x32xf32>
    %37 = tpu.matmul %36, %4, %cst_11 {dimension_numbers = #tpu.dot_dimension_numbers<[1], [0], [0], [1], [0, 0, 1, 1], [], []>} : vector<2x32xbf16>, vector<32x32xbf16>, vector<2x32xf32> -> vector<2x32xf32>
    %38 = vector.extract_strided_slice %2 {offsets = [12, 0], sizes = [2, 32], strides = [1, 1]} : vector<16x32xf32> to vector<2x32xf32>
    %39 = arith.addf %38, %37 : vector<2x32xf32>
    %40 = math.tanh %39 : vector<2x32xf32>
    %41 = arith.truncf %40 : vector<2x32xf32> to vector<2x32xbf16>
    %cst_12 = arith.constant dense<0.000000e+00> : vector<2x32xf32>
    %42 = tpu.matmul %41, %4, %cst_12 {dimension_numbers = #tpu.dot_dimension_numbers<[1], [0], [0], [1], [0, 0, 1, 1], [], []>} : vector<2x32xbf16>, vector<32x32xbf16>, vector<2x32xf32> -> vector<2x32xf32>
    %43 = vector.extract_strided_slice %2 {offsets = [14, 0], sizes = [2, 32], strides = [1, 1]} : vector<16x32xf32> to vector<2x32xf32>
    %44 = arith.addf %43, %42 : vector<2x32xf32>
    %45 = math.tanh %44 : vector<2x32xf32>
    %c40 = arith.constant 40 : index
    %c0_13 = arith.constant 0 : index
    %46 = vector.load %arg1[%c40, %c0_13] : memref<80x32xf32, #tpu.memory_space<vmem>>, vector<32x32xf32>
    %c72 = arith.constant 72 : index
    %c0_14 = arith.constant 0 : index
    %47 = vector.load %arg1[%c72, %c0_14] : memref<80x32xf32, #tpu.memory_space<vmem>>, vector<1x32xf32>
    %cst_15 = arith.constant dense<0.000000e+00> : vector<2x32xf32>
    %48 = tpu.matmul %45, %46, %cst_15 {dimension_numbers = #tpu.dot_dimension_numbers<[1], [0], [0], [1], [0, 0, 1, 1], [], []>} : vector<2x32xf32>, vector<32x32xf32>, vector<2x32xf32> -> vector<2x32xf32>
    %49 = vector.broadcast %47 : vector<1x32xf32> to vector<2x32xf32>
    %50 = arith.addf %48, %49 : vector<2x32xf32>
    %51 = vector.extract_strided_slice %50 {offsets = [0, 0], sizes = [2, 2], strides = [1, 1]} : vector<2x32xf32> to vector<2x2xf32>
    %c0_16 = arith.constant 0 : index
    %c0_17 = arith.constant 0 : index
    %52 = vector.load %arg2[%c0_16, %c0_17] : memref<2x2xf32, #tpu.memory_space<vmem>>, vector<2x2xf32>
    tpu.vector_store %arg2[%c0_16, %c0_17], %51 {strides = array<i32>} : memref<2x2xf32, #tpu.memory_space<vmem>>, vector<2x2xf32>,
    return
  }
}

</mosaic_0001>

<llo_original>
// kernel: rnn_forward.1
$region0: #{rnn_forward.1}
  #allocation0 [shape = 'u32[]', space=smem, size = 0x4, offset = 0x4, fixed_abs, tag = 'smem constant byte address 0x4 - core index']
  #allocation1 [shape = 'u32[144,128]{1,0:T(1,128)}', space=vmem, size = 0x12000, scoped, tag = 'internal scratch']
  %s0 = inlined_call_operand.vmem [shape: f32[16,8], index: 0, kind: input, shape index: {}]
  %s1 = inlined_call_operand.vmem [shape: f32[80,32], index: 1, kind: input, shape index: {}]
  %s2 = inlined_call_operand.hbm [shape: f32[2,2], index: 2, kind: output, shape index: {}]
  %s3 = sld [smem:[#allocation0]]
  $region18: #{rnn_forward.1} parent=0
    _
  %s5 = ssub.s32 1, %s3
  %s6 = scalar_select 0, %s5, %s3
  $region1: #{rnn_forward.1} parent=0
    #allocation2 [shape = 'u8[1024]{0}', space=vmem, size = 0x400, scoped, tag = 'output window, operand 0, single buffered']
    #allocation3 [shape = 's32[1]{0}', space=sflag, size = 0x4, scoped, tag = 'scoped memory for rnn_forward.1']
    %7 = vsyncpa [#allocation3], 0
    // Predicated region
    $region2: #{rnn_forward.1} parent=1 // pred_check
      _
    $region3: #{rnn_forward.1} parent=1 // pred_check_branch
      %9 = sbr.rel (0) target = $region5
    $region4: #{rnn_forward.1} parent=1 // pred_region
      _
    $region5: #{rnn_forward.1} parent=1 // pred_fallthru
      _
    // Predicated region
    $region6: #{rnn_forward.1} parent=1 // pred_check
      _
    $region7: #{rnn_forward.1} parent=1 // pred_check_branch
      %11 = sbr.rel (0) target = $region9
    $region8: #{rnn_forward.1} parent=1 // pred_region
      _
    $region9: #{rnn_forward.1} parent=1 // pred_fallthru
      _
    %v13 = vld [vmem:[%s1] sm:$0xff]
    %v14 = vld [vmem:[%s0] sm:$0xff]
    %v15 = vld [vmem:[%s0 + $0x8] sm:$0xff]
    %vm16 = vcmask 64512
    %v18 = vsel %vm16, %v14, 0
    %v21 = vsel %vm16, %v15, 0
    %23 = vmatprep.subr.mxu0 0.0
    %24 = vmatpush1.msra.mxu0 %v13
    %25 = vmatprep.subr.mxu0 0.0
    %26 = vmatpush1.msra.mxu0 0.0
    %27 = vmatprep.subr.mxu0 0.0
    %28 = vmatpush1.msra.mxu0 0.0
    %29 = vmatprep.subr.mxu0 0.0
    %30 = vmatpush1.msra.mxu0 0.0
    %31 = vmatprep.subr.mxu0 0.0
    %32 = vmatpush1.msra.mxu0 0.0
    %33 = vmatprep.subr.mxu0 0.0
    %34 = vmatpush1.msra.mxu0 0.0
    %35 = vmatprep.subr.mxu0 0.0
    %36 = vmatpush1.msra.mxu0 0.0
    %37 = vmatprep.subr.mxu0 0.0
    %38 = vmatpush1.msra.mxu0 0.0
    %39 = vmatprep.subr.mxu0 0.0
    %40 = vmatpush1.msra.mxu0 0.0
    %41 = vmatprep.subr.mxu0 0.0
    %42 = vmatpush1.msra.mxu0 0.0
    %43 = vmatprep.subr.mxu0 0.0
    %44 = vmatpush1.msra.mxu0 0.0
    %45 = vmatprep.subr.mxu0 0.0
    %46 = vmatpush1.msra.mxu0 0.0
    %47 = vmatprep.subr.mxu0 0.0
    %48 = vmatpush1.msra.mxu0 0.0
    %49 = vmatprep.subr.mxu0 0.0
    %50 = vmatpush1.msra.mxu0 0.0
    %51 = vmatprep.subr.mxu0 0.0
    %52 = vmatpush1.msra.mxu0 0.0
    %53 = vmatprep.subr.mxu0 0.0
    %54 = vmatpush1.msra.mxu0 0.0
    %55 = vmatprep.subr.mxu0 0.0
    %56 = vmatpush1.msra.mxu0 0.0
    %57 = vmatprep.subr.mxu0 0.0
    %58 = vmatpush1.msra.mxu0 0.0
    %59 = vmatprep.subr.mxu0 0.0
    %60 = vmatpush1.msra.mxu0 0.0
    %61 = vmatprep.subr.mxu0 0.0
    %62 = vmatpush1.msra.mxu0 0.0
    %63 = vmatprep.subr.mxu0 0.0
    %64 = vmatpush1.msra.mxu0 0.0
    %65 = vmatprep.subr.mxu0 0.0
    %66 = vmatpush1.msra.mxu0 0.0
    %67 = vmatprep.subr.mxu0 0.0
    %68 = vmatpush1.msra.mxu0 0.0
    %69 = vmatprep.subr.mxu0 0.0
    %70 = vmatpush1.msra.mxu0 0.0
    %71 = vmatprep.subr.mxu0 0.0
    %72 = vmatpush1.msra.mxu0 0.0
    %73 = vmatprep.subr.mxu0 0.0
    %74 = vmatpush1.msra.mxu0 0.0
    %75 = vmatprep.subr.mxu0 0.0
    %76 = vmatpush1.msra.mxu0 0.0
    %77 = vmatprep.subr.mxu0 0.0
    %78 = vmatpush1.msra.mxu0 0.0
    %79 = vmatprep.subr.mxu0 0.0
    %80 = vmatpush1.msra.mxu0 0.0
    %81 = vmatprep.subr.mxu0 0.0
    %82 = vmatpush1.msra.mxu0 0.0
    %83 = vmatprep.subr.mxu0 0.0
    %84 = vmatpush1.msra.mxu0 0.0
    %85 = vmatprep.subr.mxu0 0.0
    %86 = vmatpush1.msra.mxu0 0.0
    %87 = vmatprep.mubr.f32.mxu0 0.0
    %88 = vmatmul.mubr.f32.gmra.mrb[0].mxu0 %v18
    %v89 = vpop.f32.mrb[0].mxu0
    %v90 = vadd.f32 0.0, %v89
    %v91 = vpop.f32.mrb[0].mxu0
    %92 = vmatprep.mubr.f32.mxu0 0.0
    %93 = vmatmul.mubr.f32.gmra.mrb[0].mxu0 %v21
    %v94 = vpop.f32.mrb[0].mxu0
    %v95 = vadd.f32 0.0, %v94
    %v96 = vpop.f32.mrb[0].mxu0
    %97 = vdwg.mxu0
    %v98 = vld [vmem:[%s1 + $0x8] sm:$0xff]
    %v99 = vld [vmem:[%s1 + $0x10] sm:$0xff]
    %v100 = vld [vmem:[%s1 + $0x18] sm:$0xff]
    %v101 = vld [vmem:[%s1 + $0x20] sm:$0xff]
    %v102 = vpack.c.bf16 %v99, %v98
    %v103 = vpack.c.bf16 %v101, %v100
    %vm104 = vcmask 261120
    %v106 = vsel %vm104, 0, 0
    %108 = vmatprep.subr.bf16.mxu0 0
    %109 = vmatpush1.bf16.msra.mxu0 %v102
    %110 = vmatprep.subr.bf16.mxu0 0
    %111 = vmatpush1.bf16.msra.mxu0 %v103
    %112 = vmatprep.subr.bf16.mxu0 0
    %113 = vmatpush1.bf16.msra.mxu0 0
    %114 = vmatprep.subr.bf16.mxu0 0
    %115 = vmatpush1.bf16.msra.mxu0 0
    %116 = vmatprep.subr.bf16.mxu0 0
    %117 = vmatpush1.bf16.msra.mxu0 0
    %118 = vmatprep.subr.bf16.mxu0 0
    %119 = vmatpush1.bf16.msra.mxu0 0
    %120 = vmatprep.subr.bf16.mxu0 0
    %121 = vmatpush1.bf16.msra.mxu0 0
    %122 = vmatprep.subr.bf16.mxu0 0
    %123 = vmatpush1.bf16.msra.mxu0 0
    %124 = vmatprep.subr.bf16.mxu0 0
    %125 = vmatpush1.bf16.msra.mxu0 0
    %126 = vmatprep.subr.bf16.mxu0 0
    %127 = vmatpush1.bf16.msra.mxu0 0
    %128 = vmatprep.subr.bf16.mxu0 0
    %129 = vmatpush1.bf16.msra.mxu0 0
    %130 = vmatprep.subr.bf16.mxu0 0
    %131 = vmatpush1.bf16.msra.mxu0 0
    %132 = vmatprep.subr.bf16.mxu0 0
    %133 = vmatpush1.bf16.msra.mxu0 0
    %134 = vmatprep.subr.bf16.mxu0 0
    %135 = vmatpush1.bf16.msra.mxu0 0
    %136 = vmatprep.subr.bf16.mxu0 0
    %137 = vmatpush1.bf16.msra.mxu0 0
    %138 = vmatprep.subr.bf16.mxu0 0
    %139 = vmatpush1.bf16.msra.mxu0 0
    %140 = vmatprep.mubr.bf16.mxu0 0
    %141 = vmatmul.mubr.bf16.gmra.mrb[0].mxu0 %v106
    %v142 = vpop.f32.mrb[0].mxu0
    %v143 = vadd.f32 0.0, %v142
    %v144 = vpop.f32.mrb[0].mxu0
    %v145 = vpop.f32.mrb[0].mxu0
    %v146 = vpop.f32.mrb[0].mxu0
    %147 = vdwg.mxu0
    %v148 = vadd.f32 %v90, %v143
    %v149 = vtanh.pop %v148
    %v150 = vpack.c.bf16 %v149, %v149
    %v152 = vsel %vm104, %v150, 0
    %154 = vmatprep.subr.bf16.mxu0 0
    %155 = vmatpush1.bf16.msra.mxu0 %v102
    %156 = vmatprep.subr.bf16.mxu0 0
    %157 = vmatpush1.bf16.msra.mxu0 %v103
    %158 = vmatprep.subr.bf16.mxu0 0
    %159 = vmatpush1.bf16.msra.mxu0 0
    %160 = vmatprep.subr.bf16.mxu0 0
    %161 = vmatpush1.bf16.msra.mxu0 0
    %162 = vmatprep.subr.bf16.mxu0 0
    %163 = vmatpush1.bf16.msra.mxu0 0
    %164 = vmatprep.subr.bf16.mxu0 0
    %165 = vmatpush1.bf16.msra.mxu0 0
    %166 = vmatprep.subr.bf16.mxu0 0
    %167 = vmatpush1.bf16.msra.mxu0 0
    %168 = vmatprep.subr.bf16.mxu0 0
    %169 = vmatpush1.bf16.msra.mxu0 0
    %170 = vmatprep.subr.bf16.mxu0 0
    %171 = vmatpush1.bf16.msra.mxu0 0
    %172 = vmatprep.subr.bf16.mxu0 0
    %173 = vmatpush1.bf16.msra.mxu0 0
    %174 = vmatprep.subr.bf16.mxu0 0
    %175 = vmatpush1.bf16.msra.mxu0 0
    %176 = vmatprep.subr.bf16.mxu0 0
    %177 = vmatpush1.bf16.msra.mxu0 0
    %178 = vmatprep.subr.bf16.mxu0 0
    %179 = vmatpush1.bf16.msra.mxu0 0
    %180 = vmatprep.subr.bf16.mxu0 0
    %181 = vmatpush1.bf16.msra.mxu0 0
    %182 = vmatprep.subr.bf16.mxu0 0
    %183 = vmatpush1.bf16.msra.mxu0 0
    %184 = vmatprep.subr.bf16.mxu0 0
    %185 = vmatpush1.bf16.msra.mxu0 0
    %186 = vmatprep.mubr.bf16.mxu0 0
    %187 = vmatmul.mubr.bf16.gmra.mrb[0].mxu0 %v152
    %v188 = vpop.f32.mrb[0].mxu0
    %v189 = vadd.f32 0.0, %v188
    %v190 = vpop.f32.mrb[0].mxu0
    %v191 = vpop.f32.mrb[0].mxu0
    %v192 = vpop.f32.mrb[0].mxu0
    %193 = vdwg.mxu0
    %v195 = vrot.slane %v189, 6
    %v197 = vadd.f32 %v90, %v195
    %v198 = vtanh.pop %v197
    %v199 = vpack.c.bf16 %v198, %v198
    %v201 = vrot.slane %v199, 1
    %v203 = vsel %vm104, %v201, 0
    %205 = vmatprep.subr.bf16.mxu0 0
    %206 = vmatpush1.bf16.msra.mxu0 %v102
    %207 = vmatprep.subr.bf16.mxu0 0
    %208 = vmatpush1.bf16.msra.mxu0 %v103
    %209 = vmatprep.subr.bf16.mxu0 0
    %210 = vmatpush1.bf16.msra.mxu0 0
    %211 = vmatprep.subr.bf16.mxu0 0
    %212 = vmatpush1.bf16.msra.mxu0 0
    %213 = vmatprep.subr.bf16.mxu0 0
    %214 = vmatpush1.bf16.msra.mxu0 0
    %215 = vmatprep.subr.bf16.mxu0 0
    %216 = vmatpush1.bf16.msra.mxu0 0
    %217 = vmatprep.subr.bf16.mxu0 0
    %218 = vmatpush1.bf16.msra.mxu0 0
    %219 = vmatprep.subr.bf16.mxu0 0
    %220 = vmatpush1.bf16.msra.mxu0 0
    %221 = vmatprep.subr.bf16.mxu0 0
    %222 = vmatpush1.bf16.msra.mxu0 0
    %223 = vmatprep.subr.bf16.mxu0 0
    %224 = vmatpush1.bf16.msra.mxu0 0
    %225 = vmatprep.subr.bf16.mxu0 0
    %226 = vmatpush1.bf16.msra.mxu0 0
    %227 = vmatprep.subr.bf16.mxu0 0
    %228 = vmatpush1.bf16.msra.mxu0 0
    %229 = vmatprep.subr.bf16.mxu0 0
    %230 = vmatpush1.bf16.msra.mxu0 0
    %231 = vmatprep.subr.bf16.mxu0 0
    %232 = vmatpush1.bf16.msra.mxu0 0
    %233 = vmatprep.subr.bf16.mxu0 0
    %234 = vmatpush1.bf16.msra.mxu0 0
    %235 = vmatprep.subr.bf16.mxu0 0
    %236 = vmatpush1.bf16.msra.mxu0 0
    %237 = vmatprep.mubr.bf16.mxu0 0
    %238 = vmatmul.mubr.bf16.gmra.mrb[0].mxu0 %v203
    %v239 = vpop.f32.mrb[0].mxu0
    %v240 = vadd.f32 0.0, %v239
    %v241 = vpop.f32.mrb[0].mxu0
    %v242 = vpop.f32.mrb[0].mxu0
    %v243 = vpop.f32.mrb[0].mxu0
    %244 = vdwg.mxu0
    %v246 = vrot.slane %v240, 4
    %v248 = vadd.f32 %v90, %v246
    %v249 = vtanh.pop %v248
    %v250 = vpack.c.bf16 %v249, %v249
    %v252 = vrot.slane %v250, 2
    %v254 = vsel %vm104, %v252, 0
    %256 = vmatprep.subr.bf16.mxu0 0
    %257 = vmatpush1.bf16.msra.mxu0 %v102
    %258 = vmatprep.subr.bf16.mxu0 0
    %259 = vmatpush1.bf16.msra.mxu0 %v103
    %260 = vmatprep.subr.bf16.mxu0 0
    %261 = vmatpush1.bf16.msra.mxu0 0
    %262 = vmatprep.subr.bf16.mxu0 0
    %263 = vmatpush1.bf16.msra.mxu0 0
    %264 = vmatprep.subr.bf16.mxu0 0
    %265 = vmatpush1.bf16.msra.mxu0 0
    %266 = vmatprep.subr.bf16.mxu0 0
    %267 = vmatpush1.bf16.msra.mxu0 0
    %268 = vmatprep.subr.bf16.mxu0 0
    %269 = vmatpush1.bf16.msra.mxu0 0
    %270 = vmatprep.subr.bf16.mxu0 0
    %271 = vmatpush1.bf16.msra.mxu0 0
    %272 = vmatprep.subr.bf16.mxu0 0
    %273 = vmatpush1.bf16.msra.mxu0 0
    %274 = vmatprep.subr.bf16.mxu0 0
    %275 = vmatpush1.bf16.msra.mxu0 0
    %276 = vmatprep.subr.bf16.mxu0 0
    %277 = vmatpush1.bf16.msra.mxu0 0
    %278 = vmatprep.subr.bf16.mxu0 0
    %279 = vmatpush1.bf16.msra.mxu0 0
    %280 = vmatprep.subr.bf16.mxu0 0
    %281 = vmatpush1.bf16.msra.mxu0 0
    %282 = vmatprep.subr.bf16.mxu0 0
    %283 = vmatpush1.bf16.msra.mxu0 0
    %284 = vmatprep.subr.bf16.mxu0 0
    %285 = vmatpush1.bf16.msra.mxu0 0
    %286 = vmatprep.subr.bf16.mxu0 0
    %287 = vmatpush1.bf16.msra.mxu0 0
    %288 = vmatprep.mubr.bf16.mxu0 0
    %289 = vmatmul.mubr.bf16.gmra.mrb[0].mxu0 %v254
    %v290 = vpop.f32.mrb[0].mxu0
    %v291 = vadd.f32 0.0, %v290
    %v292 = vpop.f32.mrb[0].mxu0
    %v293 = vpop.f32.mrb[0].mxu0
    %v294 = vpop.f32.mrb[0].mxu0
    %295 = vdwg.mxu0
    %v297 = vrot.slane %v291, 2
    %v299 = vadd.f32 %v90, %v297
    %v300 = vtanh.pop %v299
    %v301 = vpack.c.bf16 %v300, %v300
    %v303 = vrot.slane %v301, 3
    %v305 = vsel %vm104, %v303, 0
    %307 = vmatprep.subr.bf16.mxu0 0
    %308 = vmatpush1.bf16.msra.mxu0 %v102
    %309 = vmatprep.subr.bf16.mxu0 0
    %310 = vmatpush1.bf16.msra.mxu0 %v103
    %311 = vmatprep.subr.bf16.mxu0 0
    %312 = vmatpush1.bf16.msra.mxu0 0
    %313 = vmatprep.subr.bf16.mxu0 0
    %314 = vmatpush1.bf16.msra.mxu0 0
    %315 = vmatprep.subr.bf16.mxu0 0
    %316 = vmatpush1.bf16.msra.mxu0 0
    %317 = vmatprep.subr.bf16.mxu0 0
    %318 = vmatpush1.bf16.msra.mxu0 0
    %319 = vmatprep.subr.bf16.mxu0 0
    %320 = vmatpush1.bf16.msra.mxu0 0
    %321 = vmatprep.subr.bf16.mxu0 0
    %322 = vmatpush1.bf16.msra.mxu0 0
    %323 = vmatprep.subr.bf16.mxu0 0
    %324 = vmatpush1.bf16.msra.mxu0 0
    %325 = vmatprep.subr.bf16.mxu0 0
    %326 = vmatpush1.bf16.msra.mxu0 0
    %327 = vmatprep.subr.bf16.mxu0 0
    %328 = vmatpush1.bf16.msra.mxu0 0
    %329 = vmatprep.subr.bf16.mxu0 0
    %330 = vmatpush1.bf16.msra.mxu0 0
    %331 = vmatprep.subr.bf16.mxu0 0
    %332 = vmatpush1.bf16.msra.mxu0 0
    %333 = vmatprep.subr.bf16.mxu0 0
    %334 = vmatpush1.bf16.msra.mxu0 0
    %335 = vmatprep.subr.bf16.mxu0 0
    %336 = vmatpush1.bf16.msra.mxu0 0
    %337 = vmatprep.subr.bf16.mxu0 0
    %338 = vmatpush1.bf16.msra.mxu0 0
    %339 = vmatprep.mubr.bf16.mxu0 0
    %340 = vmatmul.mubr.bf16.gmra.mrb[0].mxu0 %v305
    %v341 = vpop.f32.mrb[0].mxu0
    %v342 = vadd.f32 0.0, %v341
    %v343 = vpop.f32.mrb[0].mxu0
    %v344 = vpop.f32.mrb[0].mxu0
    %v345 = vpop.f32.mrb[0].mxu0
    %346 = vdwg.mxu0
    %v347 = vadd.f32 %v95, %v342
    %v348 = vtanh.pop %v347
    %v349 = vpack.c.bf16 %v348, %v348
    %v351 = vsel %vm104, %v349, 0
    %353 = vmatprep.subr.bf16.mxu0 0
    %354 = vmatpush1.bf16.msra.mxu0 %v102
    %355 = vmatprep.subr.bf16.mxu0 0
    %356 = vmatpush1.bf16.msra.mxu0 %v103
    %357 = vmatprep.subr.bf16.mxu0 0
    %358 = vmatpush1.bf16.msra.mxu0 0
    %359 = vmatprep.subr.bf16.mxu0 0
    %360 = vmatpush1.bf16.msra.mxu0 0
    %361 = vmatprep.subr.bf16.mxu0 0
    %362 = vmatpush1.bf16.msra.mxu0 0
    %363 = vmatprep.subr.bf16.mxu0 0
    %364 = vmatpush1.bf16.msra.mxu0 0
    %365 = vmatprep.subr.bf16.mxu0 0
    %366 = vmatpush1.bf16.msra.mxu0 0
    %367 = vmatprep.subr.bf16.mxu0 0
    %368 = vmatpush1.bf16.msra.mxu0 0
    %369 = vmatprep.subr.bf16.mxu0 0
    %370 = vmatpush1.bf16.msra.mxu0 0
    %371 = vmatprep.subr.bf16.mxu0 0
    %372 = vmatpush1.bf16.msra.mxu0 0
    %373 = vmatprep.subr.bf16.mxu0 0
    %374 = vmatpush1.bf16.msra.mxu0 0
    %375 = vmatprep.subr.bf16.mxu0 0
    %376 = vmatpush1.bf16.msra.mxu0 0
    %377 = vmatprep.subr.bf16.mxu0 0
    %378 = vmatpush1.bf16.msra.mxu0 0
    %379 = vmatprep.subr.bf16.mxu0 0
    %380 = vmatpush1.bf16.msra.mxu0 0
    %381 = vmatprep.subr.bf16.mxu0 0
    %382 = vmatpush1.bf16.msra.mxu0 0
    %383 = vmatprep.subr.bf16.mxu0 0
    %384 = vmatpush1.bf16.msra.mxu0 0
    %385 = vmatprep.mubr.bf16.mxu0 0
    %386 = vmatmul.mubr.bf16.gmra.mrb[0].mxu0 %v351
    %v387 = vpop.f32.mrb[0].mxu0
    %v388 = vadd.f32 0.0, %v387
    %v389 = vpop.f32.mrb[0].mxu0
    %v390 = vpop.f32.mrb[0].mxu0
    %v391 = vpop.f32.mrb[0].mxu0
    %392 = vdwg.mxu0
    %v394 = vrot.slane %v388, 6
    %v396 = vadd.f32 %v95, %v394
    %v397 = vtanh.pop %v396
    %v398 = vpack.c.bf16 %v397, %v397
    %v400 = vrot.slane %v398, 1
    %v402 = vsel %vm104, %v400, 0
    %404 = vmatprep.subr.bf16.mxu0 0
    %405 = vmatpush1.bf16.msra.mxu0 %v102
    %406 = vmatprep.subr.bf16.mxu0 0
    %407 = vmatpush1.bf16.msra.mxu0 %v103
    %408 = vmatprep.subr.bf16.mxu0 0
    %409 = vmatpush1.bf16.msra.mxu0 0
    %410 = vmatprep.subr.bf16.mxu0 0
    %411 = vmatpush1.bf16.msra.mxu0 0
    %412 = vmatprep.subr.bf16.mxu0 0
    %413 = vmatpush1.bf16.msra.mxu0 0
    %414 = vmatprep.subr.bf16.mxu0 0
    %415 = vmatpush1.bf16.msra.mxu0 0
    %416 = vmatprep.subr.bf16.mxu0 0
    %417 = vmatpush1.bf16.msra.mxu0 0
    %418 = vmatprep.subr.bf16.mxu0 0
    %419 = vmatpush1.bf16.msra.mxu0 0
    %420 = vmatprep.subr.bf16.mxu0 0
    %421 = vmatpush1.bf16.msra.mxu0 0
    %422 = vmatprep.subr.bf16.mxu0 0
    %423 = vmatpush1.bf16.msra.mxu0 0
    %424 = vmatprep.subr.bf16.mxu0 0
    %425 = vmatpush1.bf16.msra.mxu0 0
    %426 = vmatprep.subr.bf16.mxu0 0
    %427 = vmatpush1.bf16.msra.mxu0 0
    %428 = vmatprep.subr.bf16.mxu0 0
    %429 = vmatpush1.bf16.msra.mxu0 0
    %430 = vmatprep.subr.bf16.mxu0 0
    %431 = vmatpush1.bf16.msra.mxu0 0
    %432 = vmatprep.subr.bf16.mxu0 0
    %433 = vmatpush1.bf16.msra.mxu0 0
    %434 = vmatprep.subr.bf16.mxu0 0
    %435 = vmatpush1.bf16.msra.mxu0 0
    %436 = vmatprep.mubr.bf16.mxu0 0
    %437 = vmatmul.mubr.bf16.gmra.mrb[0].mxu0 %v402
    %v438 = vpop.f32.mrb[0].mxu0
    %v439 = vadd.f32 0.0, %v438
    %v440 = vpop.f32.mrb[0].mxu0
    %v441 = vpop.f32.mrb[0].mxu0
    %v442 = vpop.f32.mrb[0].mxu0
    %443 = vdwg.mxu0
    %v445 = vrot.slane %v439, 4
    %v447 = vadd.f32 %v95, %v445
    %v448 = vtanh.pop %v447
    %v449 = vpack.c.bf16 %v448, %v448
    %v451 = vrot.slane %v449, 2
    %v453 = vsel %vm104, %v451, 0
    %455 = vmatprep.subr.bf16.mxu0 0
    %456 = vmatpush1.bf16.msra.mxu0 %v102
    %457 = vmatprep.subr.bf16.mxu0 0
    %458 = vmatpush1.bf16.msra.mxu0 %v103
    %459 = vmatprep.subr.bf16.mxu0 0
    %460 = vmatpush1.bf16.msra.mxu0 0
    %461 = vmatprep.subr.bf16.mxu0 0
    %462 = vmatpush1.bf16.msra.mxu0 0
    %463 = vmatprep.subr.bf16.mxu0 0
    %464 = vmatpush1.bf16.msra.mxu0 0
    %465 = vmatprep.subr.bf16.mxu0 0
    %466 = vmatpush1.bf16.msra.mxu0 0
    %467 = vmatprep.subr.bf16.mxu0 0
    %468 = vmatpush1.bf16.msra.mxu0 0
    %469 = vmatprep.subr.bf16.mxu0 0
    %470 = vmatpush1.bf16.msra.mxu0 0
    %471 = vmatprep.subr.bf16.mxu0 0
    %472 = vmatpush1.bf16.msra.mxu0 0
    %473 = vmatprep.subr.bf16.mxu0 0
    %474 = vmatpush1.bf16.msra.mxu0 0
    %475 = vmatprep.subr.bf16.mxu0 0
    %476 = vmatpush1.bf16.msra.mxu0 0
    %477 = vmatprep.subr.bf16.mxu0 0
    %478 = vmatpush1.bf16.msra.mxu0 0
    %479 = vmatprep.subr.bf16.mxu0 0
    %480 = vmatpush1.bf16.msra.mxu0 0
    %481 = vmatprep.subr.bf16.mxu0 0
    %482 = vmatpush1.bf16.msra.mxu0 0
    %483 = vmatprep.subr.bf16.mxu0 0
    %484 = vmatpush1.bf16.msra.mxu0 0
    %485 = vmatprep.subr.bf16.mxu0 0
    %486 = vmatpush1.bf16.msra.mxu0 0
    %487 = vmatprep.mubr.bf16.mxu0 0
    %488 = vmatmul.mubr.bf16.gmra.mrb[0].mxu0 %v453
    %v489 = vpop.f32.mrb[0].mxu0
    %v490 = vadd.f32 0.0, %v489
    %v491 = vpop.f32.mrb[0].mxu0
    %v492 = vpop.f32.mrb[0].mxu0
    %v493 = vpop.f32.mrb[0].mxu0
    %494 = vdwg.mxu0
    %v496 = vrot.slane %v490, 2
    %v498 = vadd.f32 %v95, %v496
    %v499 = vtanh.pop %v498
    %v500 = vld [vmem:[%s1 + $0x28] sm:$0xff]
    %v501 = vld [vmem:[%s1 + $0x30] sm:$0xff]
    %v502 = vld [vmem:[%s1 + $0x38] sm:$0xff]
    %v503 = vld [vmem:[%s1 + $0x40] sm:$0xff]
    %v504 = vld [vmem:[%s1 + $0x48] sm:$0x1]
    %v505 = vlaneseq
    %v506 = vshrl.u32 %v505, 7
    %v507 = vsub.s32 0, %v506
    %v508 = vrot.slane %v504, %v507
    %v510 = vrot.slane %v499, 6
    %v511 = vsel %vm104, %v510, 0
    %513 = vmatprep.subr.mxu0 0.0
    %514 = vmatpush1.msra.mxu0 %v500
    %515 = vmatprep.subr.mxu0 0.0
    %516 = vmatpush1.msra.mxu0 %v501
    %517 = vmatprep.subr.mxu0 0.0
    %518 = vmatpush1.msra.mxu0 %v502
    %519 = vmatprep.subr.mxu0 0.0
    %520 = vmatpush1.msra.mxu0 %v503
    %521 = vmatprep.subr.mxu0 0.0
    %522 = vmatpush1.msra.mxu0 0.0
    %523 = vmatprep.subr.mxu0 0.0
    %524 = vmatpush1.msra.mxu0 0.0
    %525 = vmatprep.subr.mxu0 0.0
    %526 = vmatpush1.msra.mxu0 0.0
    %527 = vmatprep.subr.mxu0 0.0
    %528 = vmatpush1.msra.mxu0 0.0
    %529 = vmatprep.subr.mxu0 0.0
    %530 = vmatpush1.msra.mxu0 0.0
    %531 = vmatprep.subr.mxu0 0.0
    %532 = vmatpush1.msra.mxu0 0.0
    %533 = vmatprep.subr.mxu0 0.0
    %534 = vmatpush1.msra.mxu0 0.0
    %535 = vmatprep.subr.mxu0 0.0
    %536 = vmatpush1.msra.mxu0 0.0
    %537 = vmatprep.subr.mxu0 0.0
    %538 = vmatpush1.msra.mxu0 0.0
    %539 = vmatprep.subr.mxu0 0.0
    %540 = vmatpush1.msra.mxu0 0.0
    %541 = vmatprep.subr.mxu0 0.0
    %542 = vmatpush1.msra.mxu0 0.0
    %543 = vmatprep.subr.mxu0 0.0
    %544 = vmatpush1.msra.mxu0 0.0
    %545 = vmatprep.subr.mxu0 0.0
    %546 = vmatpush1.msra.mxu0 0.0
    %547 = vmatprep.subr.mxu0 0.0
    %548 = vmatpush1.msra.mxu0 0.0
    %549 = vmatprep.subr.mxu0 0.0
    %550 = vmatpush1.msra.mxu0 0.0
    %551 = vmatprep.subr.mxu0 0.0
    %552 = vmatpush1.msra.mxu0 0.0
    %553 = vmatprep.subr.mxu0 0.0
    %554 = vmatpush1.msra.mxu0 0.0
    %555 = vmatprep.subr.mxu0 0.0
    %556 = vmatpush1.msra.mxu0 0.0
    %557 = vmatprep.subr.mxu0 0.0
    %558 = vmatpush1.msra.mxu0 0.0
    %559 = vmatprep.subr.mxu0 0.0
    %560 = vmatpush1.msra.mxu0 0.0
    %561 = vmatprep.subr.mxu0 0.0
    %562 = vmatpush1.msra.mxu0 0.0
    %563 = vmatprep.subr.mxu0 0.0
    %564 = vmatpush1.msra.mxu0 0.0
    %565 = vmatprep.subr.mxu0 0.0
    %566 = vmatpush1.msra.mxu0 0.0
    %567 = vmatprep.subr.mxu0 0.0
    %568 = vmatpush1.msra.mxu0 0.0
    %569 = vmatprep.subr.mxu0 0.0
    %570 = vmatpush1.msra.mxu0 0.0
    %571 = vmatprep.subr.mxu0 0.0
    %572 = vmatpush1.msra.mxu0 0.0
    %573 = vmatprep.subr.mxu0 0.0
    %574 = vmatpush1.msra.mxu0 0.0
    %575 = vmatprep.subr.mxu0 0.0
    %576 = vmatpush1.msra.mxu0 0.0
    %577 = vmatprep.mubr.f32.mxu0 0.0
    %578 = vmatmul.mubr.f32.gmra.mrb[0].mxu0 %v511
    %v579 = vpop.f32.mrb[0].mxu0
    %v580 = vadd.f32 %v508, %v579
    %v581 = vpop.f32.mrb[0].mxu0
    %582 = vdwg.mxu0
    %vm583 = vcmask 9216
    %584 = vst.msk [vmem:[#allocation2] sm:$0x3] %vm583, %v580
    // Predicated region
    $region10: #{rnn_forward.1} parent=1 // pred_check
      _
    $region11: #{rnn_forward.1} parent=1 // pred_check_branch
      %586 = sbr.rel (0) target = $region13
    $region12: #{rnn_forward.1} parent=1 // pred_region
      %s588 = ssub.s32 32, 32
      %589 = vsyncadd [#allocation3], %s588
      %s591 = sshll.u32 [#allocation2], 4
      %s592 = int_to_ptr.vmem [resolvable:$true] %s591
      %594 = dma.vmem_to_hbm [thread:$0]  %s592, 32, %s2, [#allocation3]
    $region13: #{rnn_forward.1} parent=1 // pred_fallthru
      _
    // Predicated region
    $region14: #{rnn_forward.1} parent=1 // pred_check
      _
    $region15: #{rnn_forward.1} parent=1 // pred_check_branch
      %596 = sbr.rel (0) target = $region17
    $region16: #{rnn_forward.1} parent=1 // pred_region
      %597 = dma.done [#allocation3], 32
    $region17: #{rnn_forward.1} parent=1 // pred_fallthru
      _
    %598 = vsyncpa [#allocation3], 1

</llo_original>
